<compile_context>
chip_gen: v6e
topology: v6e:2x2x1
jax: 0.10.0
libtpu: 0.0.40
codegen_flags: <defaults>
</compile_context>

<pallas_src>
import jax
import jax.numpy as jnp
from jax.experimental import pallas as pl
from jax.experimental.pallas import tpu as pltpu


def identity_encoding(features: jax.Array, *_, **__) -> jax.Array:
    """IdentityEncoding.forward: dummy positional encoding doing nothing."""
    # Fast path: zero kernels, zero HBM traffic -- strictly fastest everywhere.
    return features


def _identity_dma_kernel(x_hbm_ref, o_hbm_ref, sem):
    # Single HBM -> HBM DMA: no VMEM staging, no grid loop, no vector slots.
    cp = pltpu.make_async_copy(x_hbm_ref, o_hbm_ref, sem)
    cp.start()
    cp.wait()


def identity_encoding_copy(features: jax.Array, *_, **__) -> jax.Array:
    """Same semantics as IdentityEncoding.forward, but materializes a fresh
    copy of `features` via one HBM->HBM DMA issued from a Pallas kernel."""
    if features.size == 0:
        # Nothing to copy; preserve shape/dtype.
        return features

    return pl.pallas_call(
        _identity_dma_kernel,
        out_shape=jax.ShapeDtypeStruct(features.shape, features.dtype),
        in_specs=[pl.BlockSpec(memory_space=pl.ANY)],
        out_specs=pl.BlockSpec(memory_space=pl.ANY),
        scratch_shapes=[pltpu.SemaphoreType.DMA(())],
    )(features)


if __name__ == "__main__":
    key = jax.random.PRNGKey(0)
    # Small NCHW-like feature map, consistent with typical position-encoding usage.
    x = jax.random.normal(key, (2, 4, 16, 16), dtype=jnp.float32)

    # True forward path: no kernel, no HBM traffic.
    out = identity_encoding(x)
    jax.block_until_ready(out)
    assert out.shape == x.shape and out.dtype == x.dtype, (out.shape, out.dtype)
    assert bool(jnp.all(out == x)), "identity (fast path) output mismatch"

    # Explicit Pallas copy path: single HBM->HBM DMA.
    out_copy = identity_encoding_copy(x)
    jax.block_until_ready(out_copy)
    assert out_copy.shape == x.shape and out_copy.dtype == x.dtype, (
        out_copy.shape,
        out_copy.dtype,
    )
    assert bool(jnp.all(out_copy == x)), "identity (pallas DMA copy) output mismatch"

    # Non-128-divisible shape + packed dtype: DMA copy is layout-agnostic, so no
    # masked-store penalty and no special-case tiling needed.
    y = jax.random.normal(jax.random.PRNGKey(1), (3, 5, 7), dtype=jnp.bfloat16)
    out_y = identity_encoding_copy(y)
    jax.block_until_ready(out_y)
    assert out_y.shape == y.shape and out_y.dtype == y.dtype, (out_y.shape, out_y.dtype)
    assert bool(jnp.all(out_y == y)), "identity (pallas DMA copy, odd shape) mismatch"

    # 1-D sequence-like input (the module accepts any shape).
    z = jax.random.normal(jax.random.PRNGKey(2), (8, 32), dtype=jnp.float32)
    out_z = identity_encoding_copy(z)
    jax.block_until_ready(out_z)
    assert bool(jnp.all(out_z == z)), "identity (pallas DMA copy, 2-D) mismatch"

    print("KERNEL_OK")
</pallas_src>

<mosaic_0001>
module attributes {stable_mosaic.version = 11 : i64} {
  func.func @_identity_dma_kernel(%arg0: memref<2x4x16x16xf32, #tpu.memory_space<any>>, %arg1: memref<2x4x16x16xf32, #tpu.memory_space<any>>, %arg2: memref<!tpu.dma_semaphore, #tpu.memory_space<semaphore_mem>>) attributes {dimension_semantics = [], scalar_prefetch = 0 : i64, scratch_operands = 1 : i64, tpu.core_type = #tpu.core_type<tc>} {
    tpu.enqueue_dma source(%arg0 : memref<2x4x16x16xf32, #tpu.memory_space<any>>) target(%arg1 : memref<2x4x16x16xf32, #tpu.memory_space<any>>) target_semaphore(%arg2 : memref<!tpu.dma_semaphore, #tpu.memory_space<semaphore_mem>>)
    tpu.wait_dma2 semaphore(%arg2 : memref<!tpu.dma_semaphore, #tpu.memory_space<semaphore_mem>>) src(%arg0 : memref<2x4x16x16xf32, #tpu.memory_space<any>>) dst(%arg1 : memref<2x4x16x16xf32, #tpu.memory_space<any>>)
    return
  }
}

</mosaic_0001>

<llo_original>
// kernel: tpu_custom_call.1
$region0: #{tpu_custom_call.1}
  #allocation0 [shape = 'u32[]', space=smem, size = 0x4, offset = 0x4, fixed_abs, tag = 'smem constant byte address 0x4 - core index']
  #allocation1 [shape = 'u32[144,128]{1,0:T(1,128)}', space=vmem, size = 0x12000, scoped, tag = 'internal scratch']
  #allocation2 [shape = 's32[1]{0}', space=sflag, size = 0x4, scoped, tag = 'scratch operand']
  #allocation3 [shape = 's32[]', space=sflag, size = 0x4, offset = 0, fixed_abs, tag = 'sflag constant byte address 0x0 - dummy sync flag']
  #allocation4 [shape = 'u32[0]{0}', space=smem, size = 0, offset = 0, fixed_abs, tag = 'smem constant byte address 0x0 - null']
  %s0 = inlined_call_operand.hbm [shape: f32[2,4,16,16], index: 0, kind: input, shape index: {}]
  %s1 = inlined_call_operand.hbm [shape: f32[2,4,16,16], index: 1, kind: output, shape index: {}]
  %s2 = sld [smem:[#allocation0]]
  $region2: #{tpu_custom_call.1} parent=0
    _
  %s4 = ssub.s32 1, %s2
  %s5 = scalar_select 0, %s4, %s2
  %s7 = sshll.u32 1, 14
  %s8 = sxor.u32 4294967295, %s7
  %12 = dma.general %s0, 2048, %s1, [#allocation2], 131072, [#allocation4], 0, 0
  %s13 = smul.u32 2, 4
  %s14 = smul.u32 %s13, 16
  %s15 = smul.u32 %s14, 1
  %s16 = sshll.u32 %s15, 4
  %17 = dma.done [#allocation2], %s16
  %18 = vsyncmov [#allocation2]
  %s19 = vpop.sfrf %18
  %p20 = scmp.eq.s32.totalorder %s19, 0
  %p21 = pneg %p20
  %23 = shalt.err (%p21)

</llo_original>
